<compile_context>
chip_gen: v5e
topology: v5e:2x2
jax: 0.10.0
libtpu: 0.0.40
codegen_flags: <defaults>
</compile_context>

<pallas_src>
import jax
import jax.numpy as jnp
from jax.experimental import pallas as pl
from jax.experimental.pallas import tpu as pltpu


_TARGET_TILE_BYTES = 4 * 1024 * 1024   # ~4 MiB x-tile (amortizes per-step overhead on v7x)
_MAX_ROW_BLOCK = 2048                  # bounds (rblk, 1) -> (rblk, 128) param padding in VMEM
_LANE = 128
_VMEM_LIMIT_BYTES = 48 * 1024 * 1024   # headroom under v7x's 64 MiB physical VMEM


def _affine_kernel(scale_ref, shift_ref, x_ref, o_ref):
    # scale/shift broadcast against the (rblk, cblk) x tile:
    #   per-row path : (rblk, 1)  -> broadcast along lanes
    #   per-col path : (1, cblk)  -> broadcast along sublanes
    # f32 params promote bf16/int inputs to f32; single final cast back.
    y = x_ref[...] * scale_ref[...] + shift_ref[...]
    o_ref[...] = y.astype(o_ref.dtype)


def _choose_blocks(rows, cols, itemsize, param_row_bytes, param_col_bytes):
    """Pick (rblk, cblk) so tiles sit near _TARGET_TILE_BYTES incl. param VMEM."""
    packing = max(1, 4 // itemsize)          # f32:1  bf16:2  int8/fp8:4
    r_mult = 8 * packing                     # packed sublane multiple
    min_rows = rows if rows < r_mult else r_mult

    # Column block: full width unless a minimal-height stripe already exceeds
    # the tile budget (huge spatial maps) -> lane-dense multiples of 128.
    col_cost = min_rows * itemsize + param_col_bytes
    if cols * col_cost <= _TARGET_TILE_BYTES or cols <= _LANE:
        cblk = cols                          # full extent satisfies (8,128) rule
    else:
        cblk = (_TARGET_TILE_BYTES // col_cost) // _LANE * _LANE
        cblk = int(max(_LANE, min(cblk, (cols // _LANE) * _LANE)))

    # Row block: fill the remaining budget; include padded param VMEM per row.
    row_cost = cblk * itemsize + param_row_bytes
    rblk = max(1, _TARGET_TILE_BYTES // row_cost)
    rblk = min(rblk, rows, _MAX_ROW_BLOCK)
    if rows >= r_mult:
        rblk = max(r_mult, (rblk // r_mult) * r_mult)   # packed-sublane aligned
    else:
        rblk = rows                                      # full extent (< 8 rows)

    # v7x megacore: avoid collapsing a mid-sized input to a single grid block.
    if (pl.cdiv(rows, rblk) == 1 and pl.cdiv(cols, cblk) == 1
            and rows >= 2 * r_mult
            and rows * cols * itemsize >= (1 << 20)):
        half = -(-rows // 2)
        rblk = -(-half // r_mult) * r_mult

    return int(rblk), int(cblk)


def affine_channel_2d(x, weight, bias, running_mean, running_var, eps=1e-5):
    """Channel-wise affine transform of NCHW input (AffineChannel2d.forward)."""
    N, C, H, W = x.shape
    hw = H * W
    itemsize = jnp.dtype(x.dtype).itemsize

    # Tiny per-channel parameter math: plain JAX glue, kept in f32.
    f32 = jnp.float32
    scale = weight.astype(f32) * jax.lax.rsqrt(running_var.astype(f32) + eps)
    shift = bias.astype(f32) - running_mean.astype(f32) * scale

    # Lane-density heuristic.  Per-row layout (rows=N*C, cols=H*W) keeps param
    # traffic tiny, but wastes lanes / shrinks DMA bursts when H*W is small or
    # far from a multiple of 128.  In that regime fold channels into the lane
    # axis (rows=N, cols=C*H*W) and stream a repeat-expanded param table once.
    padded_hw = pl.cdiv(hw, _LANE) * _LANE
    lane_waste = 1.0 - hw / padded_hw
    params_along_rows = (lane_waste <= 0.125) and (hw * itemsize >= 512)

    if params_along_rows:
        rows, cols = N * C, hw
        # Row r = n*C + c of the (N*C, H*W) view uses channel c's parameters.
        scale_op = jnp.tile(scale, N).reshape(rows, 1)
        shift_op = jnp.tile(shift, N).reshape(rows, 1)
        param_row_bytes, param_col_bytes = 2 * _LANE * 4, 0   # (rblk,128) f32 x2
    else:
        rows, cols = N, C * hw
        # Column j = c*H*W + p of the (N, C*H*W) view uses channel c's params.
        scale_op = jnp.repeat(scale, hw).reshape(1, cols)
        shift_op = jnp.repeat(shift, hw).reshape(1, cols)
        param_row_bytes, param_col_bytes = 0, 2 * 4           # two f32 per column

    x2d = x.reshape(rows, cols)
    rblk, cblk = _choose_blocks(rows, cols, itemsize,
                                param_row_bytes, param_col_bytes)
    n_r, n_c = pl.cdiv(rows, rblk), pl.cdiv(cols, cblk)

    if params_along_rows:
        # Params depend on the row block -> rows on the OUTER (slow) grid axis,
        # so scale/shift are re-DMA'd only when the row block changes.
        grid = (n_r, n_c)
        x_map = lambda i, j: (i, j)
        p_map = lambda i, j: (i, 0)
        p_block = (rblk, 1)
    else:
        # Params depend on the column block -> columns on the OUTER axis, so
        # the expanded table is streamed exactly once over the whole grid.
        grid = (n_c, n_r)
        x_map = lambda j, i: (i, j)
        p_map = lambda j, i: (0, j)
        p_block = (1, cblk)

    grid_spec = pltpu.PrefetchScalarGridSpec(
        num_scalar_prefetch=0,
        grid=grid,
        in_specs=[
            pl.BlockSpec(p_block, p_map),            # scale (f32)
            pl.BlockSpec(p_block, p_map),            # shift (f32)
            pl.BlockSpec((rblk, cblk), x_map),       # x
        ],
        out_specs=pl.BlockSpec((rblk, cblk), x_map),
    )

    y2d = pl.pallas_call(
        _affine_kernel,
        out_shape=jax.ShapeDtypeStruct((rows, cols), x.dtype),
        grid_spec=grid_spec,
        compiler_params=pltpu.CompilerParams(
            dimension_semantics=("parallel", "parallel"),
            vmem_limit_bytes=_VMEM_LIMIT_BYTES,
        ),
    )(scale_op, shift_op, x2d)

    return y2d.reshape(N, C, H, W)


if __name__ == "__main__":
    # Small shapes consistent with the module: NCHW input, per-channel buffers.
    N, C, H, W = 2, 4, 16, 16
    eps = 1e-5

    key = jax.random.PRNGKey(0)
    kx, kw, kb, km, kv = jax.random.split(key, 5)

    x = jax.random.normal(kx, (N, C, H, W), dtype=jnp.float32)

    # Module __init__ gives: weight=ones, bias=zeros, mean=zeros, var=ones-eps.
    # Perturb deterministically so the affine transform is non-trivial.
    weight = jnp.ones((C,), jnp.float32) + 0.1 * jax.random.normal(kw, (C,))
    bias = jnp.zeros((C,), jnp.float32) + 0.1 * jax.random.normal(kb, (C,))
    running_mean = jnp.zeros((C,), jnp.float32) + 0.1 * jax.random.normal(km, (C,))
    running_var = (jnp.ones((C,), jnp.float32) - eps) * (
        1.0 + 0.05 * jax.random.uniform(kv, (C,))
    )

    y = affine_channel_2d(x, weight, bias, running_mean, running_var, eps=eps)
    y = jax.block_until_ready(y)

    # Pure-JAX reference (same math as F.batch_norm in eval mode).
    scale = weight * jax.lax.rsqrt(running_var + eps)
    shift = bias - running_mean * scale
    y_ref = x * scale[None, :, None, None] + shift[None, :, None, None]

    assert y.shape == x.shape and y.dtype == x.dtype
    assert jnp.allclose(y, y_ref, atol=1e-5, rtol=1e-5)
    print("KERNEL_OK")
</pallas_src>

<mosaic_0001>
module attributes {stable_mosaic.version = 11 : i64} {
  func.func @_affine_kernel(%arg0: i32, %arg1: i32, %arg2: memref<8x1xf32, #tpu.memory_space<vmem>>, %arg3: memref<8x1xf32, #tpu.memory_space<vmem>>, %arg4: memref<8x256xf32, #tpu.memory_space<vmem>>, %arg5: memref<8x256xf32, #tpu.memory_space<vmem>>) attributes {dimension_semantics = [#tpu.dimension_semantics<parallel>, #tpu.dimension_semantics<parallel>], iteration_bounds = array<i64: 1, 1>, scalar_prefetch = 0 : i64, scratch_operands = 0 : i64, tpu.core_type = #tpu.core_type<tc>, window_params = [{transform_indices = @transform_0, window_bounds = array<i64: 8, 1>}, {transform_indices = @transform_1, window_bounds = array<i64: 8, 1>}, {transform_indices = @transform_2, window_bounds = array<i64: 8, 256>}, {transform_indices = @transform_3, window_bounds = array<i64: 8, 256>}]} {
    %c0 = arith.constant 0 : index
    %c0_0 = arith.constant 0 : index
    %0 = vector.load %arg4[%c0, %c0_0] : memref<8x256xf32, #tpu.memory_space<vmem>>, vector<8x256xf32>
    %c0_1 = arith.constant 0 : index
    %c0_2 = arith.constant 0 : index
    %1 = vector.load %arg2[%c0_1, %c0_2] : memref<8x1xf32, #tpu.memory_space<vmem>>, vector<8x1xf32>
    %2 = vector.broadcast %1 : vector<8x1xf32> to vector<8x256xf32>
    %3 = arith.mulf %0, %2 : vector<8x256xf32>
    %c0_3 = arith.constant 0 : index
    %c0_4 = arith.constant 0 : index
    %4 = vector.load %arg3[%c0_3, %c0_4] : memref<8x1xf32, #tpu.memory_space<vmem>>, vector<8x1xf32>
    %5 = vector.broadcast %4 : vector<8x1xf32> to vector<8x256xf32>
    %6 = arith.addf %3, %5 : vector<8x256xf32>
    %c0_5 = arith.constant 0 : index
    %c0_6 = arith.constant 0 : index
    %7 = vector.load %arg5[%c0_5, %c0_6] : memref<8x256xf32, #tpu.memory_space<vmem>>, vector<8x256xf32>
    tpu.vector_store %arg5[%c0_5, %c0_6], %6 {strides = array<i32>} : memref<8x256xf32, #tpu.memory_space<vmem>>, vector<8x256xf32>,
    return
  }
  func.func @transform_0(%arg0: i32, %arg1: i32) -> (i32, i32) {
    %c0_i32 = arith.constant 0 : i32
    %c0_i32_0 = arith.constant 0 : i32
    return %arg0, %c0_i32 : i32, i32
  }
  func.func @transform_1(%arg0: i32, %arg1: i32) -> (i32, i32) {
    %c0_i32 = arith.constant 0 : i32
    %c0_i32_0 = arith.constant 0 : i32
    return %arg0, %c0_i32 : i32, i32
  }
  func.func @transform_2(%arg0: i32, %arg1: i32) -> (i32, i32) {
    %c0_i32 = arith.constant 0 : i32
    return %arg0, %arg1 : i32, i32
  }
  func.func @transform_3(%arg0: i32, %arg1: i32) -> (i32, i32) {
    %c0_i32 = arith.constant 0 : i32
    return %arg0, %arg1 : i32, i32
  }
}

</mosaic_0001>

<llo_original>
// kernel: tpu_custom_call.1
$region0: #{tpu_custom_call.1}
  #allocation0 [shape = 'u32[]', space=smem, size = 0x4, offset = 0x4, fixed_abs, tag = 'smem constant byte address 0x4 - core index']
  #allocation1 [shape = 'u32[72,128]{1,0:T(1,128)}', space=vmem, size = 0x9000, scoped, tag = 'internal scratch']
  %s0 = inlined_call_operand.vmem [shape: f32[8,1], index: 0, kind: input, shape index: {}]
  %s1 = inlined_call_operand.vmem [shape: f32[8,1], index: 1, kind: input, shape index: {}]
  %s2 = inlined_call_operand.vmem [shape: f32[8,256], index: 2, kind: input, shape index: {}]
  %s3 = inlined_call_operand.hbm [shape: f32[8,256], index: 3, kind: output, shape index: {}]
  %s4 = sld [smem:[#allocation0]]
  $region22: #{tpu_custom_call.1} parent=0
    _
  %s6 = ssub.s32 1, %s4
  %s7 = scalar_select 0, %s6, %s4
  $region1: #{tpu_custom_call.1} parent=0
    #allocation2 [shape = 'u8[8192]{0}', space=vmem, size = 0x2000, scoped, tag = 'output window, operand 0, single buffered']
    #allocation3 [shape = 's32[1]{0}', space=sflag, size = 0x4, scoped, tag = 'scoped memory for tpu_custom_call.1']
    %8 = vsyncpa [#allocation3], 0
    // Predicated region
    $region2: #{tpu_custom_call.1} parent=1 // pred_check
      _
    $region3: #{tpu_custom_call.1} parent=1 // pred_check_branch
      %10 = sbr.rel (0) target = $region5
    $region4: #{tpu_custom_call.1} parent=1 // pred_region
      _
    $region5: #{tpu_custom_call.1} parent=1 // pred_fallthru
      _
    // Predicated region
    $region6: #{tpu_custom_call.1} parent=1 // pred_check
      _
    $region7: #{tpu_custom_call.1} parent=1 // pred_check_branch
      %12 = sbr.rel (0) target = $region9
    $region8: #{tpu_custom_call.1} parent=1 // pred_region
      _
    $region9: #{tpu_custom_call.1} parent=1 // pred_fallthru
      _
    // Predicated region
    $region10: #{tpu_custom_call.1} parent=1 // pred_check
      _
    $region11: #{tpu_custom_call.1} parent=1 // pred_check_branch
      %14 = sbr.rel (0) target = $region13
    $region12: #{tpu_custom_call.1} parent=1 // pred_region
      _
    $region13: #{tpu_custom_call.1} parent=1 // pred_fallthru
      _
    %v15 = vld [vmem:[%s2] sm:$0xff]
    %v16 = vld [vmem:[%s2 + $0x8] sm:$0xff]
    %v17 = vld [vmem:[%s0] sm:$0xff]
    %19 = vset.pattern.permute.xlu0 0
    %20 = vperm.xlu0 %19, %v17
    %v21 = vpop.permute.xlu0 %20
    %v23 = vmul.f32 %v15, %v21
    %v24 = vmul.f32 %v16, %v21
    %v25 = vld [vmem:[%s1] sm:$0xff]
    %27 = vset.pattern.permute.xlu0 0
    %28 = vperm.xlu0 %27, %v25
    %v29 = vpop.permute.xlu0 %28
    %v31 = vadd.f32 %v23, %v29
    %v32 = vadd.f32 %v24, %v29
    %33 = vst [vmem:[#allocation2] sm:$0xff] %v31
    %34 = vst [vmem:[#allocation2 + $0x8] sm:$0xff] %v32
    // Predicated region
    $region14: #{tpu_custom_call.1} parent=1 // pred_check
      _
    $region15: #{tpu_custom_call.1} parent=1 // pred_check_branch
      %36 = sbr.rel (0) target = $region17
    $region16: #{tpu_custom_call.1} parent=1 // pred_region
      %38 = vsyncadd [#allocation3], 0
      %s40 = sshll.u32 [#allocation2], 4
      %s41 = int_to_ptr.vmem [resolvable:$true] %s40
      %s42 = sshll.u32 %s3, 4
      %s43 = int_to_ptr.hbm [resolvable:$true] %s42
      %45 = dma.vmem_to_hbm [thread:$0]  %s41, 256, %s43, [#allocation3]
    $region17: #{tpu_custom_call.1} parent=1 // pred_fallthru
      _
    // Predicated region
    $region18: #{tpu_custom_call.1} parent=1 // pred_check
      _
    $region19: #{tpu_custom_call.1} parent=1 // pred_check_branch
      %47 = sbr.rel (0) target = $region21
    $region20: #{tpu_custom_call.1} parent=1 // pred_region
      %49 = dma.done [#allocation3], 256
    $region21: #{tpu_custom_call.1} parent=1 // pred_fallthru
      _
    %50 = vsyncpa [#allocation3], 1

</llo_original>
